<compile_context>
chip_gen: v5e
topology: v5e:2x2
jax: 0.10.0
libtpu: 0.0.40
codegen_flags: <defaults>
</compile_context>

<pallas_src>
import functools
import math

import jax
import jax.numpy as jnp
from jax.experimental import pallas as pl
from jax.experimental.pallas import tpu as pltpu

_NEG = float("-inf")                  # identity for max / soft-max masking
_LANE_TILE_CAP = 2048                 # multiple of 128


def _round_up(x, m):
    return ((x + m - 1) // m) * m


def _cdiv(a, b):
    return -(-a // b)


def _sublane_multiple(dtype):
    return max(8, 32 // jnp.dtype(dtype).itemsize)


def _vmem_params():
    """Returns (block budget bytes, vmem_limit_bytes, two_tensorcores)."""
    try:
        cap = pltpu.get_tpu_info().vmem_capacity_bytes
    except Exception:
        cap = None
    if cap is not None and cap > 64 * 1024 * 1024:
        # v5e / v6e: 128 MiB physical VMEM, single TensorCore per chip.
        return 48 * 1024 * 1024, 64 * 1024 * 1024, False
    if cap is not None:
        # v7x-class: 64 MiB physical VMEM, 2 TensorCores per chip.
        return 22 * 1024 * 1024, 32 * 1024 * 1024, True
    # Unknown chip: conservative sizes, no forced parallel split.
    return 22 * 1024 * 1024, 32 * 1024 * 1024, False


# ---------------------------------------------------------------------------
# Kernels: minor-axis (lane) reduction of a [TM, TN] block -> [TM, 1]
# Grid = (row tiles [parallel], reduction tiles [arbitrary]).
# ---------------------------------------------------------------------------
def _max_last_kernel(x_ref, o_ref, acc_ref, *, n_total, tn, mask_tail):
    k = pl.program_id(1)
    z = x_ref[...].astype(jnp.float32)
    if mask_tail:                                   # trace-time decision
        col = jax.lax.broadcasted_iota(jnp.int32, z.shape, 1) + k * tn
        z = jnp.where(col < n_total, z, _NEG)
    blk = jnp.max(z, axis=-1, keepdims=True)

    @pl.when(k == 0)
    def _init():
        acc_ref[...] = blk

    @pl.when(k > 0)
    def _update():
        acc_ref[...] = jnp.maximum(acc_ref[...], blk)

    @pl.when(k == pl.num_programs(1) - 1)
    def _finalize():
        o_ref[...] = acc_ref[...].astype(o_ref.dtype)


def _softmax_last_kernel(x_ref, o_ref, m_ref, s_ref, *, scale, inv_scale,
                         n_total, tn, mask_tail):
    # TODO(synk): on v7x this branch is EUP-bound; a bf16 exp (f32 sum)
    # would roughly double EUP throughput there.
    k = pl.program_id(1)
    z = x_ref[...].astype(jnp.float32) * scale
    if mask_tail:
        col = jax.lax.broadcasted_iota(jnp.int32, z.shape, 1) + k * tn
        z = jnp.where(col < n_total, z, _NEG)
    m_blk = jnp.max(z, axis=-1, keepdims=True)
    s_blk = jnp.sum(jnp.exp(z - m_blk), axis=-1, keepdims=True)

    @pl.when(k == 0)
    def _init():
        m_ref[...] = m_blk
        s_ref[...] = s_blk

    @pl.when(k > 0)
    def _update():
        m_old = m_ref[...]
        m_new = jnp.maximum(m_old, m_blk)
        s_ref[...] = (s_ref[...] * jnp.exp(m_old - m_new)
                      + s_blk * jnp.exp(m_blk - m_new))
        m_ref[...] = m_new

    @pl.when(k == pl.num_programs(1) - 1)
    def _finalize():
        o_ref[...] = ((m_ref[...] + jnp.log(s_ref[...])) * inv_scale
                      ).astype(o_ref.dtype)


# ---------------------------------------------------------------------------
# Kernels: middle-axis (sublane) reduction of a [TP, TR, TQ] block
# -> packed [TP, TQ] (lane-dense, 2-D accumulators / output).
# Grid = (P tiles [parallel], Q tiles [parallel], R tiles [arbitrary]).
# ---------------------------------------------------------------------------
def _max_mid_kernel(x_ref, o_ref, acc_ref, *, r_total, tr, mask_tail):
    k = pl.program_id(2)
    z = x_ref[...].astype(jnp.float32)              # (TP, TR, TQ)
    if mask_tail:
        row = jax.lax.broadcasted_iota(jnp.int32, z.shape, 1) + k * tr
        z = jnp.where(row < r_total, z, _NEG)
    blk = jnp.max(z, axis=1)                        # (TP, TQ) packed

    @pl.when(k == 0)
    def _init():
        acc_ref[...] = blk

    @pl.when(k > 0)
    def _update():
        acc_ref[...] = jnp.maximum(acc_ref[...], blk)

    @pl.when(k == pl.num_programs(2) - 1)
    def _finalize():
        o_ref[...] = acc_ref[...].astype(o_ref.dtype)


def _softmax_mid_kernel(x_ref, o_ref, m_ref, s_ref, *, scale, inv_scale,
                        r_total, tr, mask_tail):
    # TODO(synk): bf16 exp on v6e/v7x (EUP bf16 path) once precision budget
    # is confirmed; keep f32 exp on v5e.
    k = pl.program_id(2)
    z = x_ref[...].astype(jnp.float32) * scale      # (TP, TR, TQ)
    if mask_tail:
        row = jax.lax.broadcasted_iota(jnp.int32, z.shape, 1) + k * tr
        z = jnp.where(row < r_total, z, _NEG)
    # Block-local logsumexp pieces: subtraction uses the natural-layout
    # (TP, 1, TQ) block max; the online merge runs on packed (TP, TQ) only.
    m_blk3 = jnp.max(z, axis=1, keepdims=True)      # (TP, 1, TQ)
    s_blk = jnp.sum(jnp.exp(z - m_blk3), axis=1)    # (TP, TQ) packed
    m_blk = jnp.squeeze(m_blk3, axis=1)             # (TP, TQ) packed

    @pl.when(k == 0)
    def _init():
        m_ref[...] = m_blk
        s_ref[...] = s_blk

    @pl.when(k > 0)
    def _update():
        m_old = m_ref[...]
        m_new = jnp.maximum(m_old, m_blk)
        s_ref[...] = (s_ref[...] * jnp.exp(m_old - m_new)
                      + s_blk * jnp.exp(m_blk - m_new))
        m_ref[...] = m_new

    @pl.when(k == pl.num_programs(2) - 1)
    def _finalize():
        o_ref[...] = ((m_ref[...] + jnp.log(s_ref[...])) * inv_scale
                      ).astype(o_ref.dtype)


# ---------------------------------------------------------------------------
# Wrappers
# ---------------------------------------------------------------------------
def _reduce_last_axis(x2, scale, budget, vmem_limit, two_cores,
                      block_rows=None, block_red=None):
    """Reduce the minor (lane) axis of a 2-D slab [M, N] -> [M, 1]."""
    M, N = x2.shape
    dt = x2.dtype
    item = jnp.dtype(dt).itemsize
    sub = _sublane_multiple(dt)
    softmax = scale > 0
    n_scratch = 2 if softmax else 1
    tmp_mult = 2 if softmax else (0 if dt == jnp.float32 else 1)

    # Reduced-axis (lane) tile.
    if block_red is not None:
        TN = int(block_red)
    elif N <= _LANE_TILE_CAP:
        TN = N                                      # full extent, no tail mask
    else:
        TN = _LANE_TILE_CAP
    mask_tail = (N % TN) != 0
    grid_n = _cdiv(N, TN)
    lane_n = _round_up(TN, 128)

    # Row (kept) tile: double-buffered input + in-kernel f32 temporaries
    # (x*scale, exp(z-m)) + double-buffered output column + f32 accumulators.
    per_row = (2 * lane_n * item
               + tmp_mult * lane_n * 4
               + 2 * 128 * item
               + n_scratch * 128 * 4)
    budget_rows = max(sub, budget // per_row)
    if block_rows is not None:
        TM = int(block_rows)
    elif M <= min(budget_rows, 2048):
        TM = M
    else:
        TM = max(sub, (min(budget_rows, 2048) // sub) * sub)

    # v7x: make sure the parallel row axis has >= 2 blocks (2 TensorCores).
    if two_cores and block_rows is None and _cdiv(M, TM) < 2:
        tm_half = _round_up(_cdiv(M, 2), sub)
        if tm_half < M:
            TM = min(TM, tm_half)
    grid_m = _cdiv(M, TM)

    if softmax:
        kernel = functools.partial(
            _softmax_last_kernel, scale=float(scale),
            inv_scale=1.0 / float(scale), n_total=N, tn=TN,
            mask_tail=mask_tail)
        scratch = [pltpu.VMEM((TM, 1), jnp.float32),
                   pltpu.VMEM((TM, 1), jnp.float32)]
    else:
        kernel = functools.partial(
            _max_last_kernel, n_total=N, tn=TN, mask_tail=mask_tail)
        scratch = [pltpu.VMEM((TM, 1), jnp.float32)]

    # TODO(synk): the (TM, 1) output block is a masked lane store; output
    # traffic is 1/N of input so low priority, but a lane-dense (1, TM) slab
    # would remove the vst.msk epilogue if it ever shows in profiles.
    out = pl.pallas_call(
        kernel,
        out_shape=jax.ShapeDtypeStruct((M, 1), dt),
        grid_spec=pltpu.PrefetchScalarGridSpec(
            num_scalar_prefetch=0,
            grid=(grid_m, grid_n),
            in_specs=[pl.BlockSpec((TM, TN), lambda i, k: (i, k))],
            out_specs=pl.BlockSpec((TM, 1), lambda i, k: (i, 0)),
            scratch_shapes=scratch,
        ),
        compiler_params=pltpu.CompilerParams(
            dimension_semantics=("parallel", "arbitrary"),
            vmem_limit_bytes=vmem_limit,
        ),
    )(x2)
    return out                                       # (M, 1)


def _reduce_middle_axis(x3, scale, budget, vmem_limit, two_cores,
                        block_lead=None, block_red=None, block_lanes=None):
    """Reduce the middle axis of a 3-D slab [P, R, Q] -> [P, 1, Q]."""
    P, R, Q = x3.shape
    dt = x3.dtype
    item = jnp.dtype(dt).itemsize
    sub = _sublane_multiple(dt)
    softmax = scale > 0
    n_scratch = 2 if softmax else 1
    tmp_mult = 2 if softmax else (0 if dt == jnp.float32 else 1)

    # Kept (lane) tile.
    if block_lanes is not None:
        TQ = int(block_lanes)
    elif Q <= _LANE_TILE_CAP:
        TQ = Q
    else:
        TQ = _LANE_TILE_CAP
    # TODO(synk): when Q < 128 each DMA row is < 512 B and vregs are mostly
    # empty lanes; a one-time relayout putting a wide kept dim on lanes would
    # recover bandwidth for long reductions.

    # Reduced (sublane) tile: sized so ~8 kept rows of (input + f32 temps)
    # fit the budget; use the full extent when small enough.
    if block_red is not None:
        TR = int(block_red)
    else:
        lane_q0 = _round_up(TQ, 128)
        per_row_r = (2 * item + tmp_mult * 4) * lane_q0
        max_sub_r = max(sub, ((budget // 8) // per_row_r // sub) * sub)
        TR = R if _round_up(R, sub) <= max_sub_r else max_sub_r
    mask_tail = (R % TR) != 0
    grid_r = _cdiv(R, TR)

    # Leading (kept batch) tile: double-buffered input + f32 temporaries +
    # double-buffered output row + accumulator scratch per kept row.
    sub_r = _round_up(min(TR, R), sub)
    lane_q = _round_up(TQ, 128)
    per_p = (2 * sub_r * lane_q * item
             + tmp_mult * sub_r * lane_q * 4
             + 2 * lane_q * item
             + n_scratch * lane_q * 4)
    if block_lead is not None:
        TP = int(block_lead)
    else:
        TP = max(1, min(P, 1024, budget // per_p))
        if TP < P:
            TP = max(8, (TP // 8) * 8)               # output sublane alignment
            if TP > P:
                TP = P

    grid_p, grid_q = _cdiv(P, TP), _cdiv(Q, TQ)
    # v7x: >= 2 blocks on a parallel axis so both TensorCores get work.
    if (two_cores and block_lead is None and block_lanes is None
            and grid_p == 1 and grid_q == 1):
        if P > 8:
            tp_half = _round_up(_cdiv(P, 2), 8)
            if tp_half < P:
                TP = min(TP, tp_half)
        elif Q > 128:
            tq_half = _round_up(_cdiv(Q, 2), 128)
            if tq_half < Q:
                TQ = min(TQ, tq_half)
        grid_p, grid_q = _cdiv(P, TP), _cdiv(Q, TQ)

    if softmax:
        kernel = functools.partial(
            _softmax_mid_kernel, scale=float(scale),
            inv_scale=1.0 / float(scale), r_total=R, tr=TR,
            mask_tail=mask_tail)
        scratch = [pltpu.VMEM((TP, TQ), jnp.float32),
                   pltpu.VMEM((TP, TQ), jnp.float32)]
    else:
        kernel = functools.partial(
            _max_mid_kernel, r_total=R, tr=TR, mask_tail=mask_tail)
        scratch = [pltpu.VMEM((TP, TQ), jnp.float32)]

    out = pl.pallas_call(
        kernel,
        out_shape=jax.ShapeDtypeStruct((P, Q), dt),
        grid_spec=pltpu.PrefetchScalarGridSpec(
            num_scalar_prefetch=0,
            grid=(grid_p, grid_q, grid_r),
            in_specs=[pl.BlockSpec((TP, TR, TQ), lambda p, j, k: (p, k, j))],
            out_specs=pl.BlockSpec((TP, TQ), lambda p, j, k: (p, j)),
            scratch_shapes=scratch,
        ),
        compiler_params=pltpu.CompilerParams(
            dimension_semantics=("parallel", "parallel", "arbitrary"),
            vmem_limit_bytes=vmem_limit,
        ),
    )(x3)
    return out.reshape(P, 1, Q)


def maxish(x, scale, axis, *, block_rows=None, block_red=None,
           block_lanes=None, block_lead=None):
    """Pallas equivalent of Maxish.forward(x, scale, axis) (keepdim=True).

    `scale` and `axis` are Python scalars (trace-time), mirroring the PyTorch
    module which branches on `scale > 0` in Python.
    """
    x = jnp.asarray(x)
    if not jnp.issubdtype(x.dtype, jnp.floating):
        x = x.astype(jnp.float32)
    ndim = x.ndim
    ax = axis % ndim
    shape = x.shape
    P = math.prod(shape[:ax])
    R = shape[ax]
    Q = math.prod(shape[ax + 1:])
    out_shape = shape[:ax] + (1,) + shape[ax + 1:]

    budget, vmem_limit, two_cores = _vmem_params()

    if Q == 1:
        # Reduced axis is (effectively) the minor axis: lane reduction.
        red = _reduce_last_axis(x.reshape(P, R), scale, budget, vmem_limit,
                                two_cores, block_rows=block_rows,
                                block_red=block_red)
    else:
        # Interior / leading axis: sublane reduction, kept Q lane-dense.
        # (free reshape -- no moveaxis / transpose pass over HBM)
        red = _reduce_middle_axis(x.reshape(P, R, Q), scale, budget,
                                  vmem_limit, two_cores,
                                  block_lead=block_lead, block_red=block_red,
                                  block_lanes=block_lanes)
    return red.reshape(out_shape)


# Pure-JAX reference for validation.
def _maxish_ref(x, scale, axis):
    x = jnp.asarray(x, jnp.float32)
    if scale > 0:
        return jax.scipy.special.logsumexp(x * scale, axis=axis,
                                           keepdims=True) / scale
    return jnp.max(x, axis=axis, keepdims=True)


if __name__ == "__main__":
    key = jax.random.PRNGKey(0)
    k0, k1, k2, k3 = jax.random.split(key, 4)

    x = jax.random.normal(k0, (2, 4, 16, 16), dtype=jnp.float32)

    # hard-max branch (scale = -1), minor-axis reduction
    y = jax.block_until_ready(maxish(x, scale=-1, axis=-1))
    assert y.shape == (2, 4, 16, 1)
    assert jnp.allclose(y, _maxish_ref(x, -1, -1), atol=1e-6)

    # soft-max branch (scale > 0), interior-axis reduction
    y = jax.block_until_ready(maxish(x, scale=2.0, axis=1))
    assert y.shape == (2, 1, 16, 16)
    assert jnp.allclose(y, _maxish_ref(x, 2.0, 1), atol=1e-5, rtol=1e-5)

    # hard-max over the leading axis
    y = jax.block_until_ready(maxish(x, scale=-1, axis=0))
    assert y.shape == (1, 4, 16, 16)
    assert jnp.allclose(y, _maxish_ref(x, -1, 0), atol=1e-6)

    # multi-step online reduction, minor axis, ragged tail (300 % 128 != 0)
    a = jax.random.normal(k1, (4, 8, 300), dtype=jnp.float32)
    y = jax.block_until_ready(maxish(a, scale=-1, axis=-1, block_red=128))
    assert jnp.allclose(y, _maxish_ref(a, -1, -1), atol=1e-6)
    y = jax.block_until_ready(maxish(a, scale=3.0, axis=-1, block_red=128))
    assert jnp.allclose(y, _maxish_ref(a, 3.0, -1), atol=1e-5, rtol=1e-5)

    # multi-step online reduction, interior axis, ragged tail (100 % 64 != 0)
    b = jax.random.normal(k2, (2, 100, 160), dtype=jnp.float32)
    y = jax.block_until_ready(maxish(b, scale=-1, axis=1, block_red=64))
    assert jnp.allclose(y, _maxish_ref(b, -1, 1), atol=1e-6)
    y = jax.block_until_ready(maxish(b, scale=0.5, axis=1, block_red=64))
    assert jnp.allclose(y, _maxish_ref(b, 0.5, 1), atol=1e-5, rtol=1e-5)

    # unaligned kept dims, partial kept-lane blocks (no padding anywhere)
    c = jax.random.normal(k3, (3, 13, 150), dtype=jnp.float32)
    y = jax.block_until_ready(maxish(c, scale=-1, axis=1, block_lanes=128))
    assert y.shape == (3, 1, 150)
    assert jnp.allclose(y, _maxish_ref(c, -1, 1), atol=1e-6)
    y = jax.block_until_ready(maxish(c, scale=1.5, axis=1, block_lanes=128))
    assert jnp.allclose(y, _maxish_ref(c, 1.5, 1), atol=1e-5, rtol=1e-5)

    # bf16 input: output dtype matches input (as in torch)
    xb = x.astype(jnp.bfloat16)
    y = jax.block_until_ready(maxish(xb, scale=-1, axis=-1))
    assert y.dtype == jnp.bfloat16
    assert jnp.allclose(y.astype(jnp.float32),
                        _maxish_ref(xb.astype(jnp.float32), -1, -1), atol=1e-6)

    print("KERNEL_OK")
</pallas_src>

<mosaic_0001>
module attributes {stable_mosaic.version = 11 : i64} {
  func.func @_max_last_kernel(%arg0: i32, %arg1: i32, %arg2: memref<128x16xf32, #tpu.memory_space<vmem>>, %arg3: memref<128x1xf32, #tpu.memory_space<vmem>>, %arg4: memref<128x1xf32, #tpu.memory_space<vmem>>) attributes {dimension_semantics = [#tpu.dimension_semantics<parallel>, #tpu.dimension_semantics<arbitrary>], iteration_bounds = array<i64: 1, 1>, scalar_prefetch = 0 : i64, scratch_operands = 1 : i64, tpu.core_type = #tpu.core_type<tc>, window_params = [{transform_indices = @transform_0, window_bounds = array<i64: 128, 16>}, {transform_indices = @transform_1, window_bounds = array<i64: 128, 1>}]} {
    %c0 = arith.constant 0 : index
    %c0_0 = arith.constant 0 : index
    %0 = vector.load %arg2[%c0, %c0_0] : memref<128x16xf32, #tpu.memory_space<vmem>>, vector<128x16xf32>
    %cst = arith.constant dense<0xFF800000> : vector<128xf32>
    %1 = vector.multi_reduction <maximumf>, %0, %cst [1] : vector<128x16xf32> to vector<128xf32>
    %2 = vector.shape_cast %1 : vector<128xf32> to vector<128x1xf32>
    %c0_i32 = arith.constant 0 : i32
    %3 = arith.cmpi eq, %arg1, %c0_i32 : i32
    %4 = arith.extui %3 : i1 to i32
    %c0_i32_1 = arith.constant 0 : i32
    %5 = arith.cmpi ne, %4, %c0_i32_1 : i32
    scf.if %5 {
      %c0_6 = arith.constant 0 : index
      %c0_7 = arith.constant 0 : index
      %12 = vector.load %arg4[%c0_6, %c0_7] : memref<128x1xf32, #tpu.memory_space<vmem>>, vector<128x1xf32>
      tpu.vector_store %arg4[%c0_6, %c0_7], %2 {strides = array<i32>} : memref<128x1xf32, #tpu.memory_space<vmem>>, vector<128x1xf32>,
    } else {
    }
    %c0_i32_2 = arith.constant 0 : i32
    %6 = arith.cmpi sgt, %arg1, %c0_i32_2 : i32
    %7 = arith.extui %6 : i1 to i32
    %c0_i32_3 = arith.constant 0 : i32
    %8 = arith.cmpi ne, %7, %c0_i32_3 : i32
    scf.if %8 {
      %c0_6 = arith.constant 0 : index
      %c0_7 = arith.constant 0 : index
      %12 = vector.load %arg4[%c0_6, %c0_7] : memref<128x1xf32, #tpu.memory_space<vmem>>, vector<128x1xf32>
      %13 = arith.maximumf %12, %2 : vector<128x1xf32>
      %c0_8 = arith.constant 0 : index
      %c0_9 = arith.constant 0 : index
      %14 = vector.load %arg4[%c0_8, %c0_9] : memref<128x1xf32, #tpu.memory_space<vmem>>, vector<128x1xf32>
      tpu.vector_store %arg4[%c0_8, %c0_9], %13 {strides = array<i32>} : memref<128x1xf32, #tpu.memory_space<vmem>>, vector<128x1xf32>,
    } else {
    }
    %c0_i32_4 = arith.constant 0 : i32
    %9 = arith.cmpi eq, %arg1, %c0_i32_4 : i32
    %10 = arith.extui %9 : i1 to i32
    %c0_i32_5 = arith.constant 0 : i32
    %11 = arith.cmpi ne, %10, %c0_i32_5 : i32
    scf.if %11 {
      %c0_6 = arith.constant 0 : index
      %c0_7 = arith.constant 0 : index
      %12 = vector.load %arg4[%c0_6, %c0_7] : memref<128x1xf32, #tpu.memory_space<vmem>>, vector<128x1xf32>
      %c0_8 = arith.constant 0 : index
      %c0_9 = arith.constant 0 : index
      %13 = vector.load %arg3[%c0_8, %c0_9] : memref<128x1xf32, #tpu.memory_space<vmem>>, vector<128x1xf32>
      tpu.vector_store %arg3[%c0_8, %c0_9], %12 {strides = array<i32>} : memref<128x1xf32, #tpu.memory_space<vmem>>, vector<128x1xf32>,
    } else {
    }
    return
  }
  func.func @transform_0(%arg0: i32, %arg1: i32) -> (i32, i32) {
    %c0_i32 = arith.constant 0 : i32
    return %arg0, %arg1 : i32, i32
  }
  func.func @transform_1(%arg0: i32, %arg1: i32) -> (i32, i32) {
    %c0_i32 = arith.constant 0 : i32
    %c0_i32_0 = arith.constant 0 : i32
    return %arg0, %c0_i32 : i32, i32
  }
}

</mosaic_0001>

<llo_original>
// kernel: tpu_custom_call.1
$region0: #{tpu_custom_call.1}
  #allocation0 [shape = 'u32[]', space=smem, size = 0x4, offset = 0x4, fixed_abs, tag = 'smem constant byte address 0x4 - core index']
  #allocation1 [shape = 'u32[72,128]{1,0:T(1,128)}', space=vmem, size = 0x9000, scoped, tag = 'internal scratch']
  #allocation2 [shape = 'f32[128,1]{1,0:T(8,128)}', space=vmem, size = 0x10000, scoped, tag = 'scratch operand']
  %s0 = inlined_call_operand.vmem [shape: f32[128,16], index: 0, kind: input, shape index: {}]
  %s1 = inlined_call_operand.vmem [shape: f32[128,1], index: 1, kind: output, shape index: {}]
  %s2 = sld [smem:[#allocation0]]
  $region26: #{tpu_custom_call.1} parent=0
    _
  %s4 = ssub.s32 1, %s2
  %s5 = scalar_select 0, %s4, %s2
  // Predicated region
  $region2: #{tpu_custom_call.1} parent=0 // pred_check
    _
  $region3: #{tpu_custom_call.1} parent=0 // pred_check_branch
    %7 = sbr.rel (0) target = $region5
  $region4: #{tpu_custom_call.1} parent=0 // pred_region
    _
  $region5: #{tpu_custom_call.1} parent=0 // pred_fallthru
    _
  %v8 = vld [vmem:[%s0] sm:$0xff]
  %v9 = vld [vmem:[%s0 + $0x8] sm:$0xff]
  %v10 = vld [vmem:[%s0 + $0x10] sm:$0xff]
  %v11 = vld [vmem:[%s0 + $0x18] sm:$0xff]
  %v12 = vld [vmem:[%s0 + $0x20] sm:$0xff]
  %v13 = vld [vmem:[%s0 + $0x28] sm:$0xff]
  %v14 = vld [vmem:[%s0 + $0x30] sm:$0xff]
  %v15 = vld [vmem:[%s0 + $0x38] sm:$0xff]
  %v16 = vld [vmem:[%s0 + $0x40] sm:$0xff]
  %v17 = vld [vmem:[%s0 + $0x48] sm:$0xff]
  %v18 = vld [vmem:[%s0 + $0x50] sm:$0xff]
  %v19 = vld [vmem:[%s0 + $0x58] sm:$0xff]
  %v20 = vld [vmem:[%s0 + $0x60] sm:$0xff]
  %v21 = vld [vmem:[%s0 + $0x68] sm:$0xff]
  %v22 = vld [vmem:[%s0 + $0x70] sm:$0xff]
  %v23 = vld [vmem:[%s0 + $0x78] sm:$0xff]
  %vm24 = vcmask 130048
  %v25 = vsel %vm24, %v8, -inf
  %26 = vmax.xlane.f32.xlu0 %v25
  %v27 = vpop.xlane.xlu0 %26
  %v28 = vsel %vm24, %v9, -inf
  %29 = vmax.xlane.f32.xlu0 %v28
  %v30 = vpop.xlane.xlu0 %29
  %v31 = vsel %vm24, %v10, -inf
  %32 = vmax.xlane.f32.xlu0 %v31
  %v33 = vpop.xlane.xlu0 %32
  %v34 = vsel %vm24, %v11, -inf
  %35 = vmax.xlane.f32.xlu0 %v34
  %v36 = vpop.xlane.xlu0 %35
  %v37 = vsel %vm24, %v12, -inf
  %38 = vmax.xlane.f32.xlu0 %v37
  %v39 = vpop.xlane.xlu0 %38
  %v40 = vsel %vm24, %v13, -inf
  %41 = vmax.xlane.f32.xlu0 %v40
  %v42 = vpop.xlane.xlu0 %41
  %v43 = vsel %vm24, %v14, -inf
  %44 = vmax.xlane.f32.xlu0 %v43
  %v45 = vpop.xlane.xlu0 %44
  %v46 = vsel %vm24, %v15, -inf
  %47 = vmax.xlane.f32.xlu0 %v46
  %v48 = vpop.xlane.xlu0 %47
  %v49 = vsel %vm24, %v16, -inf
  %50 = vmax.xlane.f32.xlu0 %v49
  %v51 = vpop.xlane.xlu0 %50
  %v52 = vsel %vm24, %v17, -inf
  %53 = vmax.xlane.f32.xlu0 %v52
  %v54 = vpop.xlane.xlu0 %53
  %v55 = vsel %vm24, %v18, -inf
  %56 = vmax.xlane.f32.xlu0 %v55
  %v57 = vpop.xlane.xlu0 %56
  %v58 = vsel %vm24, %v19, -inf
  %59 = vmax.xlane.f32.xlu0 %v58
  %v60 = vpop.xlane.xlu0 %59
  %v61 = vsel %vm24, %v20, -inf
  %62 = vmax.xlane.f32.xlu0 %v61
  %v63 = vpop.xlane.xlu0 %62
  %v64 = vsel %vm24, %v21, -inf
  %65 = vmax.xlane.f32.xlu0 %v64
  %v66 = vpop.xlane.xlu0 %65
  %v67 = vsel %vm24, %v22, -inf
  %68 = vmax.xlane.f32.xlu0 %v67
  %v69 = vpop.xlane.xlu0 %68
  %v70 = vsel %vm24, %v23, -inf
  %71 = vmax.xlane.f32.xlu0 %v70
  %v72 = vpop.xlane.xlu0 %71
  %p73 = scmp.eq.s32.totalorder 0, 0
  // Predicated region
  $region6: #{tpu_custom_call.1} parent=0 // pred_check
    %p74 = pneg %p73
  $region7: #{tpu_custom_call.1} parent=0 // pred_check_branch
    %76 = sbr.rel (%p74) target = $region9
  $region8: #{tpu_custom_call.1} parent=0 // pred_region
    %vm77 = vcmask 7168
    %78 = vst.msk [vmem:[#allocation2] sm:$0xff] %vm77, %v27
    %79 = vst.msk [vmem:[#allocation2 + $0x8] sm:$0xff] %vm77, %v30
    %80 = vst.msk [vmem:[#allocation2 + $0x10] sm:$0xff] %vm77, %v33
    %81 = vst.msk [vmem:[#allocation2 + $0x18] sm:$0xff] %vm77, %v36
    %82 = vst.msk [vmem:[#allocation2 + $0x20] sm:$0xff] %vm77, %v39
    %83 = vst.msk [vmem:[#allocation2 + $0x28] sm:$0xff] %vm77, %v42
    %84 = vst.msk [vmem:[#allocation2 + $0x30] sm:$0xff] %vm77, %v45
    %85 = vst.msk [vmem:[#allocation2 + $0x38] sm:$0xff] %vm77, %v48
    %86 = vst.msk [vmem:[#allocation2 + $0x40] sm:$0xff] %vm77, %v51
    %87 = vst.msk [vmem:[#allocation2 + $0x48] sm:$0xff] %vm77, %v54
    %88 = vst.msk [vmem:[#allocation2 + $0x50] sm:$0xff] %vm77, %v57
    %89 = vst.msk [vmem:[#allocation2 + $0x58] sm:$0xff] %vm77, %v60
    %90 = vst.msk [vmem:[#allocation2 + $0x60] sm:$0xff] %vm77, %v63
    %91 = vst.msk [vmem:[#allocation2 + $0x68] sm:$0xff] %vm77, %v66
    %92 = vst.msk [vmem:[#allocation2 + $0x70] sm:$0xff] %vm77, %v69
    %93 = vst.msk [vmem:[#allocation2 + $0x78] sm:$0xff] %vm77, %v72
  $region9: #{tpu_custom_call.1} parent=0 // pred_fallthru
    _
  %p94 = scmp.gt.s32.totalorder 0, 0
  // Predicated region
  $region10: #{tpu_custom_call.1} parent=0 // pred_check
    %p95 = pneg %p94
  $region11: #{tpu_custom_call.1} parent=0 // pred_check_branch
    %97 = sbr.rel (%p95) target = $region13
  $region12: #{tpu_custom_call.1} parent=0 // pred_region
    %v98 = vld [vmem:[#allocation2] sm:$0xff]
    %v99 = vld [vmem:[#allocation2 + $0x8] sm:$0xff]
    %v100 = vld [vmem:[#allocation2 + $0x10] sm:$0xff]
    %v101 = vld [vmem:[#allocation2 + $0x18] sm:$0xff]
    %v102 = vld [vmem:[#allocation2 + $0x20] sm:$0xff]
    %v103 = vld [vmem:[#allocation2 + $0x28] sm:$0xff]
    %v104 = vld [vmem:[#allocation2 + $0x30] sm:$0xff]
    %v105 = vld [vmem:[#allocation2 + $0x38] sm:$0xff]
    %v106 = vld [vmem:[#allocation2 + $0x40] sm:$0xff]
    %v107 = vld [vmem:[#allocation2 + $0x48] sm:$0xff]
    %v108 = vld [vmem:[#allocation2 + $0x50] sm:$0xff]
    %v109 = vld [vmem:[#allocation2 + $0x58] sm:$0xff]
    %v110 = vld [vmem:[#allocation2 + $0x60] sm:$0xff]
    %v111 = vld [vmem:[#allocation2 + $0x68] sm:$0xff]
    %v112 = vld [vmem:[#allocation2 + $0x70] sm:$0xff]
    %v113 = vld [vmem:[#allocation2 + $0x78] sm:$0xff]
    %v114 = vmax.f32 %v98, %v27
    %v115 = vmax.f32 %v99, %v30
    %v116 = vmax.f32 %v100, %v33
    %v117 = vmax.f32 %v101, %v36
    %v118 = vmax.f32 %v102, %v39
    %v119 = vmax.f32 %v103, %v42
    %v120 = vmax.f32 %v104, %v45
    %v121 = vmax.f32 %v105, %v48
    %v122 = vmax.f32 %v106, %v51
    %v123 = vmax.f32 %v107, %v54
    %v124 = vmax.f32 %v108, %v57
    %v125 = vmax.f32 %v109, %v60
    %v126 = vmax.f32 %v110, %v63
    %v127 = vmax.f32 %v111, %v66
    %v128 = vmax.f32 %v112, %v69
    %v129 = vmax.f32 %v113, %v72
    %vm130 = vcmask 7168
    %131 = vst.msk [vmem:[#allocation2] sm:$0xff] %vm130, %v114
    %132 = vst.msk [vmem:[#allocation2 + $0x8] sm:$0xff] %vm130, %v115
    %133 = vst.msk [vmem:[#allocation2 + $0x10] sm:$0xff] %vm130, %v116
    %134 = vst.msk [vmem:[#allocation2 + $0x18] sm:$0xff] %vm130, %v117
    %135 = vst.msk [vmem:[#allocation2 + $0x20] sm:$0xff] %vm130, %v118
    %136 = vst.msk [vmem:[#allocation2 + $0x28] sm:$0xff] %vm130, %v119
    %137 = vst.msk [vmem:[#allocation2 + $0x30] sm:$0xff] %vm130, %v120
    %138 = vst.msk [vmem:[#allocation2 + $0x38] sm:$0xff] %vm130, %v121
    %139 = vst.msk [vmem:[#allocation2 + $0x40] sm:$0xff] %vm130, %v122
    %140 = vst.msk [vmem:[#allocation2 + $0x48] sm:$0xff] %vm130, %v123
    %141 = vst.msk [vmem:[#allocation2 + $0x50] sm:$0xff] %vm130, %v124
    %142 = vst.msk [vmem:[#allocation2 + $0x58] sm:$0xff] %vm130, %v125
    %143 = vst.msk [vmem:[#allocation2 + $0x60] sm:$0xff] %vm130, %v126
    %144 = vst.msk [vmem:[#allocation2 + $0x68] sm:$0xff] %vm130, %v127
    %145 = vst.msk [vmem:[#allocation2 + $0x70] sm:$0xff] %vm130, %v128
    %146 = vst.msk [vmem:[#allocation2 + $0x78] sm:$0xff] %vm130, %v129
  $region13: #{tpu_custom_call.1} parent=0 // pred_fallthru
    _
  // Predicated region
  $region14: #{tpu_custom_call.1} parent=0 // pred_check
    %p147 = pneg %p73
  $region15: #{tpu_custom_call.1} parent=0 // pred_check_branch
    %149 = sbr.rel (%p147) target = $region17
  $region16: #{tpu_custom_call.1} parent=0 // pred_region
    %v150 = vld [vmem:[#allocation2] sm:$0xff]
    %v151 = vld [vmem:[#allocation2 + $0x8] sm:$0xff]
    %v152 = vld [vmem:[#allocation2 + $0x10] sm:$0xff]
    %v153 = vld [vmem:[#allocation2 + $0x18] sm:$0xff]
    %v154 = vld [vmem:[#allocation2 + $0x20] sm:$0xff]
    %v155 = vld [vmem:[#allocation2 + $0x28] sm:$0xff]
    %v156 = vld [vmem:[#allocation2 + $0x30] sm:$0xff]
    %v157 = vld [vmem:[#allocation2 + $0x38] sm:$0xff]
    %v158 = vld [vmem:[#allocation2 + $0x40] sm:$0xff]
    %v159 = vld [vmem:[#allocation2 + $0x48] sm:$0xff]
    %v160 = vld [vmem:[#allocation2 + $0x50] sm:$0xff]
    %v161 = vld [vmem:[#allocation2 + $0x58] sm:$0xff]
    %v162 = vld [vmem:[#allocation2 + $0x60] sm:$0xff]
    %v163 = vld [vmem:[#allocation2 + $0x68] sm:$0xff]
    %v164 = vld [vmem:[#allocation2 + $0x70] sm:$0xff]
    %v165 = vld [vmem:[#allocation2 + $0x78] sm:$0xff]
    %vm166 = vcmask 7168
    %167 = vst.msk [vmem:[%s1] sm:$0xff] %vm166, %v150
    %168 = vst.msk [vmem:[%s1 + $0x8] sm:$0xff] %vm166, %v151
    %169 = vst.msk [vmem:[%s1 + $0x10] sm:$0xff] %vm166, %v152
    %170 = vst.msk [vmem:[%s1 + $0x18] sm:$0xff] %vm166, %v153
    %171 = vst.msk [vmem:[%s1 + $0x20] sm:$0xff] %vm166, %v154
    %172 = vst.msk [vmem:[%s1 + $0x28] sm:$0xff] %vm166, %v155
    %173 = vst.msk [vmem:[%s1 + $0x30] sm:$0xff] %vm166, %v156
    %174 = vst.msk [vmem:[%s1 + $0x38] sm:$0xff] %vm166, %v157
    %175 = vst.msk [vmem:[%s1 + $0x40] sm:$0xff] %vm166, %v158
    %176 = vst.msk [vmem:[%s1 + $0x48] sm:$0xff] %vm166, %v159
    %177 = vst.msk [vmem:[%s1 + $0x50] sm:$0xff] %vm166, %v160
    %178 = vst.msk [vmem:[%s1 + $0x58] sm:$0xff] %vm166, %v161
    %179 = vst.msk [vmem:[%s1 + $0x60] sm:$0xff] %vm166, %v162
    %180 = vst.msk [vmem:[%s1 + $0x68] sm:$0xff] %vm166, %v163
    %181 = vst.msk [vmem:[%s1 + $0x70] sm:$0xff] %vm166, %v164
    %182 = vst.msk [vmem:[%s1 + $0x78] sm:$0xff] %vm166, %v165
  $region17: #{tpu_custom_call.1} parent=0 // pred_fallthru
    _
  // Predicated region
  $region18: #{tpu_custom_call.1} parent=0 // pred_check
    _
  $region19: #{tpu_custom_call.1} parent=0 // pred_check_branch
    %184 = sbr.rel (0) target = $region21
  $region20: #{tpu_custom_call.1} parent=0 // pred_region
    _
  $region21: #{tpu_custom_call.1} parent=0 // pred_fallthru
    _
  // Predicated region
  $region22: #{tpu_custom_call.1} parent=0 // pred_check
    _
  $region23: #{tpu_custom_call.1} parent=0 // pred_check_branch
    %186 = sbr.rel (0) target = $region25
  $region24: #{tpu_custom_call.1} parent=0 // pred_region
    _
  $region25: #{tpu_custom_call.1} parent=0 // pred_fallthru
    _

</llo_original>
